<compile_context>
chip_gen: v6e
topology: v6e:2x2x1
jax: 0.10.0
libtpu: 0.0.40
codegen_flags: <defaults>
</compile_context>

<pallas_src>
import jax
import jax.numpy as jnp
from jax.experimental import pallas as pl
from jax.experimental.pallas import tpu as pltpu


def _reorg_kernel(x_ref, o_ref):
    # x_ref: (1, Ct, H, W) input channel tile (resident across the quadrant axis)
    # o_ref: (1, Ct, H//2, W//2) output block for quadrant q
    q = pl.program_id(2)
    hh = o_ref.shape[2]
    hw = o_ref.shape[3]

    @pl.when(q == 0)  # pink   = x[:, :, :H//2, :W//2]
    def _():
        o_ref[...] = x_ref[:, :, :hh, :hw]

    @pl.when(q == 1)  # green  = x[:, :, H//2:, :W//2]
    def _():
        o_ref[...] = x_ref[:, :, hh:, :hw]

    @pl.when(q == 2)  # purple = x[:, :, :H//2, W//2:]
    def _():
        o_ref[...] = x_ref[:, :, :hh, hw:]

    @pl.when(q == 3)  # red    = x[:, :, H//2:, W//2:]
    def _():
        o_ref[...] = x_ref[:, :, hh:, hw:]


def _pick_channel_tile(C, H, W, itemsize, budget_bytes=2 << 20):
    """Largest divisor of C whose (Ct, H, W) input block stays under ~2 MiB.

    Keeps double-buffered input + output well inside the scoped-VMEM default on
    every generation (16 MiB v5e, 32 MiB v6e/v7x) without per-chip tuning.
    """
    best = 1
    for ct in range(1, C + 1):
        if C % ct == 0 and ct * H * W * itemsize <= budget_bytes:
            best = ct
    return best


def reorg(x):
    """Pallas ReOrg.forward. x: (N, C, H, W) -> (N, 4C, H//2, W//2)."""
    N, C, H, W = x.shape
    assert H % 2 == 0 and W % 2 == 0, "spatial dims must be even"
    hh, hw = H // 2, W // 2

    ct = _pick_channel_tile(C, H, W, x.dtype.itemsize)
    nct = C // ct

    # Quadrant q maps to output channels [q*C + c*ct, q*C + (c+1)*ct), i.e.
    # output channel-block index q*nct + c (block size ct).
    in_spec = pl.BlockSpec((1, ct, H, W), lambda n, c, q: (n, c, 0, 0))
    out_spec = pl.BlockSpec((1, ct, hh, hw), lambda n, c, q: (n, q * nct + c, 0, 0))

    nbytes = x.size * x.dtype.itemsize  # input read + output write = 2 * nbytes
    # TODO(synk): for very small W (W//2 << 128) the output stores are masked;
    # a wrapper-side flatten of (H//2, W//2) to one lane-dense dim could help,
    # but is skipped here to keep the module's NCHW layout untouched.

    return pl.pallas_call(
        _reorg_kernel,
        out_shape=jax.ShapeDtypeStruct((N, 4 * C, hh, hw), x.dtype),
        grid=(N, nct, 4),
        in_specs=[in_spec],
        out_specs=out_spec,
        compiler_params=pltpu.CompilerParams(
            dimension_semantics=("parallel", "parallel", "parallel")
        ),
        cost_estimate=pl.CostEstimate(
            flops=0, transcendentals=0, bytes_accessed=2 * nbytes
        ),
    )(x)


def reorg_reference(x):
    """Pure-JAX reference mirroring the PyTorch forward."""
    h = x.shape[2]
    w = x.shape[3]
    pink = x[:, :, : h // 2, : w // 2]
    green = x[:, :, h // 2 :, : w // 2]
    purple = x[:, :, : h // 2, w // 2 :]
    red = x[:, :, h // 2 :, w // 2 :]
    return jnp.concatenate([pink, green, purple, red], axis=1)


if __name__ == "__main__":
    key = jax.random.PRNGKey(0)
    # ReOrg has no parameters; only an input tensor is needed.
    x = jax.random.normal(key, (2, 4, 16, 16), dtype=jnp.float32)

    out = reorg(x)
    out = jax.block_until_ready(out)

    ref = reorg_reference(x)
    assert out.shape == (2, 16, 8, 8), out.shape
    assert out.dtype == x.dtype
    assert jnp.allclose(out, ref), "Pallas ReOrg mismatch vs reference"

    print("KERNEL_OK")
</pallas_src>

<mosaic_0001>
module attributes {stable_mosaic.version = 11 : i64} {
  func.func @_reorg_kernel(%arg0: i32, %arg1: i32, %arg2: i32, %arg3: memref<1x4x16x16xf32, #tpu.memory_space<vmem>>, %arg4: memref<1x4x8x8xf32, #tpu.memory_space<vmem>>) attributes {dimension_semantics = [#tpu.dimension_semantics<parallel>, #tpu.dimension_semantics<parallel>, #tpu.dimension_semantics<parallel>], iteration_bounds = array<i64: 2, 1, 4>, scalar_prefetch = 0 : i64, scratch_operands = 0 : i64, tpu.core_type = #tpu.core_type<tc>, window_params = [{transform_indices = @transform_0, window_bounds = array<i64: 1, 4, 16, 16>}, {transform_indices = @transform_1, window_bounds = array<i64: 1, 4, 8, 8>}]} {
    %c0_i32 = arith.constant 0 : i32
    %0 = arith.cmpi eq, %arg2, %c0_i32 : i32
    %1 = arith.extui %0 : i1 to i32
    %c0_i32_0 = arith.constant 0 : i32
    %2 = arith.cmpi ne, %1, %c0_i32_0 : i32
    scf.if %2 {
      %c0 = arith.constant 0 : index
      %c0_4 = arith.constant 0 : index
      %c0_5 = arith.constant 0 : index
      %c0_6 = arith.constant 0 : index
      %12 = vector.load %arg3[%c0, %c0_4, %c0_5, %c0_6] : memref<1x4x16x16xf32, #tpu.memory_space<vmem>>, vector<1x4x8x8xf32>
      %c0_7 = arith.constant 0 : index
      %c0_8 = arith.constant 0 : index
      %c0_9 = arith.constant 0 : index
      %c0_10 = arith.constant 0 : index
      %13 = vector.load %arg4[%c0_7, %c0_8, %c0_9, %c0_10] : memref<1x4x8x8xf32, #tpu.memory_space<vmem>>, vector<1x4x8x8xf32>
      tpu.vector_store %arg4[%c0_7, %c0_8, %c0_9, %c0_10], %12 {strides = array<i32>} : memref<1x4x8x8xf32, #tpu.memory_space<vmem>>, vector<1x4x8x8xf32>,
    } else {
    }
    %c1_i32 = arith.constant 1 : i32
    %3 = arith.cmpi eq, %arg2, %c1_i32 : i32
    %4 = arith.extui %3 : i1 to i32
    %c0_i32_1 = arith.constant 0 : i32
    %5 = arith.cmpi ne, %4, %c0_i32_1 : i32
    scf.if %5 {
      %c0 = arith.constant 0 : index
      %c0_4 = arith.constant 0 : index
      %c8 = arith.constant 8 : index
      %c0_5 = arith.constant 0 : index
      %12 = vector.load %arg3[%c0, %c0_4, %c8, %c0_5] : memref<1x4x16x16xf32, #tpu.memory_space<vmem>>, vector<1x4x8x8xf32>
      %c0_6 = arith.constant 0 : index
      %c0_7 = arith.constant 0 : index
      %c0_8 = arith.constant 0 : index
      %c0_9 = arith.constant 0 : index
      %13 = vector.load %arg4[%c0_6, %c0_7, %c0_8, %c0_9] : memref<1x4x8x8xf32, #tpu.memory_space<vmem>>, vector<1x4x8x8xf32>
      tpu.vector_store %arg4[%c0_6, %c0_7, %c0_8, %c0_9], %12 {strides = array<i32>} : memref<1x4x8x8xf32, #tpu.memory_space<vmem>>, vector<1x4x8x8xf32>,
    } else {
    }
    %c2_i32 = arith.constant 2 : i32
    %6 = arith.cmpi eq, %arg2, %c2_i32 : i32
    %7 = arith.extui %6 : i1 to i32
    %c0_i32_2 = arith.constant 0 : i32
    %8 = arith.cmpi ne, %7, %c0_i32_2 : i32
    scf.if %8 {
      %c0 = arith.constant 0 : index
      %c0_4 = arith.constant 0 : index
      %c0_5 = arith.constant 0 : index
      %c8 = arith.constant 8 : index
      %12 = vector.load %arg3[%c0, %c0_4, %c0_5, %c8] : memref<1x4x16x16xf32, #tpu.memory_space<vmem>>, vector<1x4x8x8xf32>
      %c0_6 = arith.constant 0 : index
      %c0_7 = arith.constant 0 : index
      %c0_8 = arith.constant 0 : index
      %c0_9 = arith.constant 0 : index
      %13 = vector.load %arg4[%c0_6, %c0_7, %c0_8, %c0_9] : memref<1x4x8x8xf32, #tpu.memory_space<vmem>>, vector<1x4x8x8xf32>
      tpu.vector_store %arg4[%c0_6, %c0_7, %c0_8, %c0_9], %12 {strides = array<i32>} : memref<1x4x8x8xf32, #tpu.memory_space<vmem>>, vector<1x4x8x8xf32>,
    } else {
    }
    %c3_i32 = arith.constant 3 : i32
    %9 = arith.cmpi eq, %arg2, %c3_i32 : i32
    %10 = arith.extui %9 : i1 to i32
    %c0_i32_3 = arith.constant 0 : i32
    %11 = arith.cmpi ne, %10, %c0_i32_3 : i32
    scf.if %11 {
      %c0 = arith.constant 0 : index
      %c0_4 = arith.constant 0 : index
      %c8 = arith.constant 8 : index
      %c8_5 = arith.constant 8 : index
      %12 = vector.load %arg3[%c0, %c0_4, %c8, %c8_5] : memref<1x4x16x16xf32, #tpu.memory_space<vmem>>, vector<1x4x8x8xf32>
      %c0_6 = arith.constant 0 : index
      %c0_7 = arith.constant 0 : index
      %c0_8 = arith.constant 0 : index
      %c0_9 = arith.constant 0 : index
      %13 = vector.load %arg4[%c0_6, %c0_7, %c0_8, %c0_9] : memref<1x4x8x8xf32, #tpu.memory_space<vmem>>, vector<1x4x8x8xf32>
      tpu.vector_store %arg4[%c0_6, %c0_7, %c0_8, %c0_9], %12 {strides = array<i32>} : memref<1x4x8x8xf32, #tpu.memory_space<vmem>>, vector<1x4x8x8xf32>,
    } else {
    }
    return
  }
  func.func @transform_0(%arg0: i32, %arg1: i32, %arg2: i32) -> (i32, i32, i32, i32) {
    %c0_i32 = arith.constant 0 : i32
    %c0_i32_0 = arith.constant 0 : i32
    %c0_i32_1 = arith.constant 0 : i32
    return %arg0, %arg1, %c0_i32, %c0_i32_0 : i32, i32, i32, i32
  }
  func.func @transform_1(%arg0: i32, %arg1: i32, %arg2: i32) -> (i32, i32, i32, i32) {
    %c1_i32 = arith.constant 1 : i32
    %0 = arith.muli %arg2, %c1_i32 : i32
    %1 = arith.addi %0, %arg1 : i32
    %c0_i32 = arith.constant 0 : i32
    %c0_i32_0 = arith.constant 0 : i32
    %c0_i32_1 = arith.constant 0 : i32
    return %arg0, %1, %c0_i32, %c0_i32_0 : i32, i32, i32, i32
  }
}

</mosaic_0001>

<llo_original>
// kernel: tpu_custom_call.1
$region0: #{tpu_custom_call.1}
  #allocation0 [shape = 'u32[]', space=smem, size = 0x4, offset = 0x4, fixed_abs, tag = 'smem constant byte address 0x4 - core index']
  #allocation1 [shape = 'u32[144,128]{1,0:T(1,128)}', space=vmem, size = 0x12000, scoped, tag = 'internal scratch']
  %s0 = inlined_call_operand.hbm [shape: f32[2,4,16,16], index: 0, kind: input, shape index: {}]
  %s1 = inlined_call_operand.vmem [shape: f32[2,16,8,8], index: 1, kind: output, shape index: {}]
  %s2 = sld [smem:[#allocation0]]
  $region57: #{tpu_custom_call.1} parent=0
    _
  %s4 = ssub.s32 1, %s2
  %s5 = scalar_select 0, %s4, %s2
  $region1: #{tpu_custom_call.1} parent=0
    #allocation2 [shape = 'u8[65536]{0}', space=vmem, size = 0x10000, scoped, tag = 'input window, operand 0']
    #allocation3 [shape = 's32[2]{0}', space=sflag, size = 0x8, scoped, tag = 'scoped memory for tpu_custom_call.1']
    %6 = vsyncpa [#allocation3], 0
    %s7 = scalar_lea.sflag [#allocation3], 1
    %8 = vsyncpa %s7, 0
    loop: start=0, step=1, limit=10
    $region2: #{tpu_custom_call.1} parent=1 // loop_pre_header
      _
    $region3: #{tpu_custom_call.1} parent=1 // loop_header
      %s10 = sphi 0, %s14
      %p11 = scmp.ge.s32.totalorder %s10, 10
      %s17 = sphi 0, %s36
      %s18 = sphi 0, %s32
      %s19 = sphi 0, %s28
      %s20 = sphi 0, %s17
      %s21 = sphi 0, %s18
      %s22 = sphi 0, %s19
      %s23 = sphi 0, %s20
      %s24 = sphi 0, %s21
      %s25 = sphi 0, %s22
      %s41 = sphi 0, %s43
      %s44 = sphi 0, %s41
      %s45 = sphi 0, %s44
      %s61 = sphi 0, %s45
      %s71 = sphi 0, %s73
      %s74 = sphi 0, %s71
      %s75 = sphi 0, %s74
      %s91 = sphi 0, %s75
    $region4: #{tpu_custom_call.1} parent=1 // loop_header_branch
      %13 = sbr.rel (%p11) target = $region8
    $region5: #{tpu_custom_call.1} parent=1 // loop_body
      %s15 = ssub.s32 %s10, 1
      %s16 = ssub.s32 %s10, 2
      %s26 = sadd.s32 1, %s19
      %p27 = scmp.ge.s32.totalorder %s26, 4
      %s28 = scalar_select %p27, 0, %s26
      %s29 = sadd.s32 1, %s18
      %s30 = scalar_select %p27, %s29, %s18
      %p31 = scmp.ge.s32.totalorder %s30, 1
      %s32 = scalar_select %p31, 0, %s30
      %s33 = sadd.s32 1, %s17
      %s34 = scalar_select %p31, %s33, %s17
      %p35 = scmp.ge.s32.totalorder %s34, 2
      %s36 = scalar_select %p35, 0, %s34
      %s37 = ssub.s32 %s17, %s36
      %s38 = ssub.s32 %s18, %s32
      %s39 = sor.u32 %s37, %s38
      %p40 = scmp.eq.s32.totalorder %s39, 0
      %s42 = sadd.s32 %s41, 1
      %s43 = scalar_select %p40, %s41, %s42
      %p46 = pneg %p40
      %p47 = scmp.eq.s32.totalorder %s10, 7
      %p48 = por %p46, %p47
      %p49 = scmp.ne.s32.totalorder %s41, %s44
      %p50 = scmp.eq.s32.totalorder %s10, 0
      %p51 = por %p49, %p50
      %p52 = scmp.ne.s32.totalorder %s41, %s44
      %p53 = scmp.eq.s32.totalorder %s15, 7
      %p54 = por %p52, %p53
      %p55 = scmp.ne.s32.totalorder %s44, %s45
      %p56 = scmp.eq.s32.totalorder %s15, 0
      %p57 = por %p55, %p56
      %p58 = scmp.ne.s32.totalorder %s44, %s45
      %p59 = scmp.eq.s32.totalorder %s16, 7
      %p60 = por %p58, %p59
      %p62 = scmp.ne.s32.totalorder %s45, %s61
      %p63 = scmp.eq.s32.totalorder %s16, 0
      %p64 = por %p62, %p63
      %s65 = sadd.s32 %s19, %s18
      %s66 = sadd.s32 %s28, %s32
      %s67 = ssub.s32 %s17, %s36
      %s68 = ssub.s32 %s65, %s66
      %s69 = sor.u32 %s67, %s68
      %p70 = scmp.eq.s32.totalorder %s69, 0
      %s72 = sadd.s32 %s71, 1
      %s73 = scalar_select %p70, %s71, %s72
      %p76 = pneg %p70
      %p77 = scmp.eq.s32.totalorder %s10, 7
      %p78 = por %p76, %p77
      %p79 = scmp.ne.s32.totalorder %s71, %s74
      %p80 = scmp.eq.s32.totalorder %s10, 0
      %p81 = por %p79, %p80
      %p82 = scmp.ne.s32.totalorder %s71, %s74
      %p83 = scmp.eq.s32.totalorder %s15, 7
      %p84 = por %p82, %p83
      %p85 = scmp.ne.s32.totalorder %s74, %s75
      %p86 = scmp.eq.s32.totalorder %s15, 0
      %p87 = por %p85, %p86
      %p88 = scmp.ne.s32.totalorder %s74, %s75
      %p89 = scmp.eq.s32.totalorder %s16, 7
      %p90 = por %p88, %p89
      %p92 = scmp.ne.s32.totalorder %s75, %s91
      %p93 = scmp.eq.s32.totalorder %s16, 0
      %p94 = por %p92, %p93
      %p95 = scmp.le.s32.totalorder 1, %s10
      %p96 = scmp.lt.s32.totalorder %s10, 9
      %p97 = pnand %p95, %p96
      %p98 = pneg %p97
      // Predicated region
      $region9: #{tpu_custom_call.1} parent=5 // pred_check
        _
      $region10: #{tpu_custom_call.1} parent=5 // pred_check_branch
        %100 = sbr.rel (%p97) target = $region12
      $region11: #{tpu_custom_call.1} parent=5 // pred_region
        %s101 = ssub.s32 %s10, 1
      $region12: #{tpu_custom_call.1} parent=5 // pred_fallthru
        _
      %p102 = scmp.lt.s32.totalorder %s10, 8
      // Predicated region
      $region13: #{tpu_custom_call.1} parent=5 // pred_check
        %p103 = pneg %p102
      $region14: #{tpu_custom_call.1} parent=5 // pred_check_branch
        %105 = sbr.rel (%p103) target = $region16
      $region15: #{tpu_custom_call.1} parent=5 // pred_region
        // Predicated region
        $region17: #{tpu_custom_call.1} parent=15 // pred_check
          %p106 = pneg %p51
        $region18: #{tpu_custom_call.1} parent=15 // pred_check_branch
          %108 = sbr.rel (%p106) target = $region20
        $region19: #{tpu_custom_call.1} parent=15 // pred_region
          %s109 = sand.u32 %s41, 1
          %s110 = scalar_lea.sflag [#allocation3], %s109
          %s111 = sand.u32 %s41, 1
          %s112 = smul.addr %s111, 64
          %s113 = scalar_lea.vmem [#allocation2], %s112
          %s114 = smul.u32 4, %s18
          %s116 = ssub.s32 1024, 1024
          %117 = vsyncadd %s110, %s116
          %s118 = smul.addr %s114, 2
          %s119 = smul.addr %s17, 8
          %s120 = sadd.s32 %s118, %s119
          %s121 = smul.addr %s120, 128
          %s122 = scalar_lea.hbm %s0, %s121
          %s123 = sshll.u32 %s113, 4
          %s124 = int_to_ptr.vmem [resolvable:$true] %s123
          %129 = dma.hbm_to_vmem [thread:$0]  %s122, 1024, %s124, %s110, 128, 128, 8
        $region20: #{tpu_custom_call.1} parent=15 // pred_fallthru
          _
      $region16: #{tpu_custom_call.1} parent=5 // pred_fallthru
        _
      %p130 = scmp.le.s32.totalorder 1, %s10
      %p131 = scmp.lt.s32.totalorder %s10, 9
      %p132 = pnand %p130, %p131
      %p133 = pneg %p132
      // Predicated region
      $region21: #{tpu_custom_call.1} parent=5 // pred_check
        _
      $region22: #{tpu_custom_call.1} parent=5 // pred_check_branch
        %135 = sbr.rel (%p132) target = $region24
      $region23: #{tpu_custom_call.1} parent=5 // pred_region
        %s136 = ssub.s32 %s10, 1
        %s137 = sand.u32 %s44, 1
        %s138 = scalar_lea.sflag [#allocation3], %s137
        %s139 = sand.u32 %s44, 1
        %s140 = smul.addr %s139, 64
        %s141 = scalar_lea.vmem [#allocation2], %s140
        // Predicated region
        $region25: #{tpu_custom_call.1} parent=23 // pred_check
          %p142 = pneg %p57
        $region26: #{tpu_custom_call.1} parent=23 // pred_check_branch
          %144 = sbr.rel (%p142) target = $region28
        $region27: #{tpu_custom_call.1} parent=23 // pred_region
          %145 = dma.done %s138, 1024
        $region28: #{tpu_custom_call.1} parent=23 // pred_fallthru
          _
        %s146 = sand.u32 %s44, 1
        %s147 = scalar_lea.sflag [#allocation3], %s146
        %s148 = sand.u32 %s44, 1
        %s149 = smul.addr %s148, 64
        %s150 = scalar_lea.vmem [#allocation2], %s149
        %p151 = pneg %p57
        %p152 = pneg %p54
        %p153 = pneg %p87
        %p154 = pneg %p84
        %s155 = sadd.s32 %s22, %s21
        %s156 = smul.u32 4, %s155
        %p157 = scmp.lt.s32.totalorder %s20, 1
        %s158 = scalar_select %p157, %s20, 1
        %p159 = scmp.lt.s32.totalorder %s156, 15
        %s160 = scalar_select %p159, %s156, 15
        %s161 = smul.addr %s158, 16
        %s162 = sadd.s32 %s160, %s161
        %s163 = smul.addr %s162, 8
        %s164 = scalar_lea.vmem %s1, %s163
        %s165 = smul.u32 4, %s21
        %s166 = sadd.s32 %s22, %s21
        %s167 = smul.u32 4, %s166
        %p168 = scmp.lt.s32.totalorder %s20, 1
        %s169 = scalar_select %p168, %s20, 1
        %p170 = scmp.lt.s32.totalorder %s167, 15
        %s171 = scalar_select %p170, %s167, 15
        %s172 = smul.addr %s169, 16
        %s173 = sadd.s32 %s171, %s172
        %s174 = smul.addr %s173, 8
        %s175 = scalar_lea.vmem %s1, %s174
        %s176 = sadd.s32 %s22, %s21
        %s177 = smul.u32 4, %s176
        %p178 = scmp.eq.s32.totalorder %s22, 0
        // Predicated region
        $region29: #{tpu_custom_call.1} parent=23 // pred_check
          %p179 = pneg %p178
        $region30: #{tpu_custom_call.1} parent=23 // pred_check_branch
          %181 = sbr.rel (%p179) target = $region32
        $region31: #{tpu_custom_call.1} parent=23 // pred_region
          %v182 = vld [vmem:[%s141] sm:$0xff]
          %v183 = vld [vmem:[%s141 + $0x10] sm:$0xff]
          %v184 = vld [vmem:[%s141 + $0x20] sm:$0xff]
          %v185 = vld [vmem:[%s141 + $0x30] sm:$0xff]
          %vm186 = vcmask 64512
          %187 = vst.msk [vmem:[%s175] sm:$0xff] %vm186, %v182
          %188 = vst.msk [vmem:[%s175 + $0x8] sm:$0xff] %vm186, %v183
          %189 = vst.msk [vmem:[%s175 + $0x10] sm:$0xff] %vm186, %v184
          %190 = vst.msk [vmem:[%s175 + $0x18] sm:$0xff] %vm186, %v185
        $region32: #{tpu_custom_call.1} parent=23 // pred_fallthru
          _
        %p191 = scmp.eq.s32.totalorder %s22, 1
        // Predicated region
        $region33: #{tpu_custom_call.1} parent=23 // pred_check
          %p192 = pneg %p191
        $region34: #{tpu_custom_call.1} parent=23 // pred_check_branch
          %194 = sbr.rel (%p192) target = $region36
        $region35: #{tpu_custom_call.1} parent=23 // pred_region
          %v195 = vld [vmem:[%s141 + $0x8] sm:$0xff]
          %v196 = vld [vmem:[%s141 + $0x18] sm:$0xff]
          %v197 = vld [vmem:[%s141 + $0x28] sm:$0xff]
          %v198 = vld [vmem:[%s141 + $0x38] sm:$0xff]
          %vm199 = vcmask 64512
          %200 = vst.msk [vmem:[%s175] sm:$0xff] %vm199, %v195
          %201 = vst.msk [vmem:[%s175 + $0x8] sm:$0xff] %vm199, %v196
          %202 = vst.msk [vmem:[%s175 + $0x10] sm:$0xff] %vm199, %v197
          %203 = vst.msk [vmem:[%s175 + $0x18] sm:$0xff] %vm199, %v198
        $region36: #{tpu_custom_call.1} parent=23 // pred_fallthru
          _
        %p204 = scmp.eq.s32.totalorder %s22, 2
        // Predicated region
        $region37: #{tpu_custom_call.1} parent=23 // pred_check
          %p205 = pneg %p204
        $region38: #{tpu_custom_call.1} parent=23 // pred_check_branch
          %207 = sbr.rel (%p205) target = $region40
        $region39: #{tpu_custom_call.1} parent=23 // pred_region
          %v208 = vld [vmem:[%s141] sm:$0xff]
          %v209 = vld [vmem:[%s141 + $0x10] sm:$0xff]
          %v210 = vld [vmem:[%s141 + $0x20] sm:$0xff]
          %v211 = vld [vmem:[%s141 + $0x30] sm:$0xff]
          %216 = vrot.lane.b32.xlu0 %v208, 120
          %v217 = vpop.permute.xlu0 %216
          %218 = vrot.lane.b32.xlu0 %v209, 120
          %v219 = vpop.permute.xlu0 %218
          %220 = vrot.lane.b32.xlu0 %v210, 120
          %v221 = vpop.permute.xlu0 %220
          %222 = vrot.lane.b32.xlu0 %v211, 120
          %v223 = vpop.permute.xlu0 %222
          %vm228 = vcmask 64512
          %229 = vst.msk [vmem:[%s175] sm:$0xff] %vm228, %v217
          %230 = vst.msk [vmem:[%s175 + $0x8] sm:$0xff] %vm228, %v219
          %231 = vst.msk [vmem:[%s175 + $0x10] sm:$0xff] %vm228, %v221
          %232 = vst.msk [vmem:[%s175 + $0x18] sm:$0xff] %vm228, %v223
        $region40: #{tpu_custom_call.1} parent=23 // pred_fallthru
          _
        %p233 = scmp.eq.s32.totalorder %s22, 3
        // Predicated region
        $region41: #{tpu_custom_call.1} parent=23 // pred_check
          %p234 = pneg %p233
        $region42: #{tpu_custom_call.1} parent=23 // pred_check_branch
          %236 = sbr.rel (%p234) target = $region44
        $region43: #{tpu_custom_call.1} parent=23 // pred_region
          %v237 = vld [vmem:[%s141 + $0x8] sm:$0xff]
          %v238 = vld [vmem:[%s141 + $0x18] sm:$0xff]
          %v239 = vld [vmem:[%s141 + $0x28] sm:$0xff]
          %v240 = vld [vmem:[%s141 + $0x38] sm:$0xff]
          %245 = vrot.lane.b32.xlu0 %v237, 120
          %v246 = vpop.permute.xlu0 %245
          %247 = vrot.lane.b32.xlu0 %v238, 120
          %v248 = vpop.permute.xlu0 %247
          %249 = vrot.lane.b32.xlu0 %v239, 120
          %v250 = vpop.permute.xlu0 %249
          %251 = vrot.lane.b32.xlu0 %v240, 120
          %v252 = vpop.permute.xlu0 %251
          %vm257 = vcmask 64512
          %258 = vst.msk [vmem:[%s175] sm:$0xff] %vm257, %v246
          %259 = vst.msk [vmem:[%s175 + $0x8] sm:$0xff] %vm257, %v248
          %260 = vst.msk [vmem:[%s175 + $0x10] sm:$0xff] %vm257, %v250
          %261 = vst.msk [vmem:[%s175 + $0x18] sm:$0xff] %vm257, %v252
        $region44: #{tpu_custom_call.1} parent=23 // pred_fallthru
          _
        %s262 = sadd.s32 %s22, %s21
        %s263 = smul.u32 4, %s262
        %p264 = scmp.lt.s32.totalorder %s20, 1
        %s265 = scalar_select %p264, %s20, 1
        %p266 = scmp.lt.s32.totalorder %s263, 15
        %s267 = scalar_select %p266, %s263, 15
        %s268 = smul.addr %s265, 16
        %s269 = sadd.s32 %s267, %s268
        %s270 = smul.addr %s269, 8
        %s271 = scalar_lea.vmem %s1, %s270
        // Predicated region
        $region45: #{tpu_custom_call.1} parent=23 // pred_check
          %p272 = pneg %p84
        $region46: #{tpu_custom_call.1} parent=23 // pred_check_branch
          %274 = sbr.rel (%p272) target = $region48
        $region47: #{tpu_custom_call.1} parent=23 // pred_region
          %s275 = sadd.s32 %s22, %s21
          %s276 = smul.u32 4, %s275
        $region48: #{tpu_custom_call.1} parent=23 // pred_fallthru
          _
      $region24: #{tpu_custom_call.1} parent=5 // pred_fallthru
        _
      %p277 = scmp.le.s32.totalorder 2, %s10
      // Predicated region
      $region49: #{tpu_custom_call.1} parent=5 // pred_check
        %p278 = pneg %p277
      $region50: #{tpu_custom_call.1} parent=5 // pred_check_branch
        %280 = sbr.rel (%p278) target = $region52
      $region51: #{tpu_custom_call.1} parent=5 // pred_region
        %s281 = ssub.s32 %s10, 2
        // Predicated region
        $region53: #{tpu_custom_call.1} parent=51 // pred_check
          %p282 = pneg %p90
        $region54: #{tpu_custom_call.1} parent=51 // pred_check_branch
          %284 = sbr.rel (%p282) target = $region56
        $region55: #{tpu_custom_call.1} parent=51 // pred_region
          %s285 = sadd.s32 %s25, %s24
          %s286 = smul.u32 4, %s285
          %p287 = scmp.lt.s32.totalorder %s23, 1
          %s288 = scalar_select %p287, %s23, 1
          %p289 = scmp.lt.s32.totalorder %s286, 15
          %s290 = scalar_select %p289, %s286, 15
          %s291 = smul.addr %s288, 16
          %s292 = sadd.s32 %s290, %s291
          %s293 = smul.addr %s292, 8
          %s294 = scalar_lea.vmem %s1, %s293
        $region56: #{tpu_custom_call.1} parent=51 // pred_fallthru
          _
      $region52: #{tpu_custom_call.1} parent=5 // pred_fallthru
        _
    $region6: #{tpu_custom_call.1} parent=1 // loop_footer
      %s14 = sadd.s32 1, %s10
    $region7: #{tpu_custom_call.1} parent=1 // loop_footer_branch
      %9 = sbr.rel target = $region3
    $region8: #{tpu_custom_call.1} parent=1 // loop_exit
      _
    %295 = vsyncpa [#allocation3], 1
    %s296 = scalar_lea.sflag [#allocation3], 1
    %297 = vsyncpa %s296, 1

</llo_original>
